<compile_context>
chip_gen: v5e
topology: v5e:2x2
jax: 0.10.0
libtpu: 0.0.40
codegen_flags: <defaults>
</compile_context>

<pallas_src>
import jax
import jax.numpy as jnp
from jax.experimental import pallas as pl
from jax.experimental.pallas import tpu as pltpu


def _shell_attention_kernel(x0_ref, x1_ref, x2_ref,
                            wm0_ref, wm1_ref, wm2_ref,
                            b1_ref, w2_ref, b2_ref,
                            out_ref):
    CL = x0_ref.shape[1]                      # C * L (lane-flattened shell)

    # Native-dtype tiles (no f32 copies held live across the kernel).
    x0 = x0_ref[...]
    x1 = x1_ref[...]
    x2 = x2_ref[...]

    # Fused "per-channel mean -> Linear(48, 24)":
    #   concat([mean_l(s_k)]) @ W1 + b1 == sum_k x_k @ Wm_k + b1
    # with Wm_k[c*L + l, :] = W1[k*C + c, :] / L (folded in the wrapper).
    h = (jnp.dot(x0, wm0_ref[...], preferred_element_type=jnp.float32)
         + jnp.dot(x1, wm1_ref[...], preferred_element_type=jnp.float32)
         + jnp.dot(x2, wm2_ref[...], preferred_element_type=jnp.float32)
         + b1_ref[...])                                                   # (tb, 24) f32

    # LeakyReLU(0.1)
    h = jnp.where(h > 0, h, 0.1 * h)

    # Linear(24 -> 3)
    logits = jnp.dot(h, w2_ref[...], preferred_element_type=jnp.float32) + b2_ref[...]  # (tb, 3)

    # Softmax over the last dim (size 3), max-subtracted.
    lmax = jnp.max(logits, axis=-1, keepdims=True)
    e = jnp.exp(logits - lmax)
    w = e * pl.reciprocal(jnp.sum(e, axis=-1, keepdims=True), approx=False)  # (tb, 3) f32

    # Scale each shell by its scalar weight in the INPUT dtype (cast the
    # tiny weight column, not the big tiles); contiguous lane-dense stores.
    dt = out_ref.dtype
    w = w.astype(x0.dtype)
    out_ref[:, 0 * CL:1 * CL] = (x0 * w[:, 0:1]).astype(dt)
    out_ref[:, 1 * CL:2 * CL] = (x1 * w[:, 1:2]).astype(dt)
    out_ref[:, 2 * CL:3 * CL] = (x2 * w[:, 2:3]).astype(dt)


def _sublane_multiple(dtype):
    # (8,128) tiles for 32-bit, (16,128) for bf16/fp16, (32,128) for int8/fp8.
    return max(8, 32 // jnp.dtype(dtype).itemsize)


def _vmem_budget_bytes():
    # Derive from the chip: v5e/v6e have 128 MiB VMEM, v7x only 64 MiB/TC.
    try:
        cap = pltpu.get_tpu_info().vmem_capacity_bytes
    except Exception:
        cap = 64 * 1024 * 1024            # conservative fallback
    return min(cap // 4, 24 * 1024 * 1024)


def _pick_batch_tile(B, CL, dtype, vmem_budget_bytes):
    sub = _sublane_multiple(dtype)
    itemsize = jnp.dtype(dtype).itemsize
    # Per batch row, per pipeline buffer: 3 input tiles (CL each) + 1 output
    # tile (3*CL); Pallas double-buffers every blocked operand.
    per_row = 6 * CL * itemsize * 2
    tb_vmem = max(sub, vmem_budget_bytes // per_row)
    # For large B, cap the tile so the grid has >= ~4 steps (v7x megacore
    # sharding + DMA/writeback overlap), but never drop below the ~512-row
    # per-step-overhead knee unless B itself is small.
    tb_split = pl.cdiv(B, 4)
    tb = min(tb_vmem, max(tb_split, 512))
    if tb >= B:
        return B                          # single full-extent block
    return max(sub, (tb // sub) * sub)    # keep dtype-correct sublane alignment


def shell_attention(shells, W1, b1, W2, b2, *, batch_tile=None):
    """shells: list of 3 arrays (B, C, L). Returns (B, 3*C, L)."""
    s0, s1, s2 = shells
    B, C, L = s0.shape
    CL = C * L
    dtype = s0.dtype
    itemsize = jnp.dtype(dtype).itemsize

    # Lane-dense layout: flatten (C, L) -> C*L on the minor axis (free reshape).
    x0 = s0.reshape(B, CL)
    x1 = s1.reshape(B, CL)
    x2 = s2.reshape(B, CL)

    # Fold the mean over L into the first Linear's weights (computed in f32,
    # then cast to the shell dtype: exact for f32 inputs, native MXU path for
    # bf16 inputs at ~1e-3 relative error).
    Wm = jnp.repeat(W1.astype(jnp.float32), L, axis=0) / jnp.float32(L)   # (3*CL, 24)
    Wm = Wm.astype(dtype)
    wm0, wm1, wm2 = Wm[0 * CL:1 * CL], Wm[1 * CL:2 * CL], Wm[2 * CL:3 * CL]
    b1_2d = b1.reshape(1, -1).astype(jnp.float32)                         # (1, 24)
    W2f = W2.astype(jnp.float32)                                          # (24, 3)
    b2_2d = b2.reshape(1, -1).astype(jnp.float32)                         # (1, 3)

    budget = _vmem_budget_bytes()
    tb = batch_tile if batch_tile is not None else _pick_batch_tile(B, CL, dtype, budget)
    grid = (pl.cdiv(B, tb),)

    # Explicit scoped-VMEM limit: double-buffered blocks + lane-padded resident
    # weights + headroom for the small f32 MLP temporaries / internal scratch.
    block_bytes = 2 * (6 * CL * itemsize) * tb
    weight_bytes = 2 * (3 * CL * 128 * 4 + 3 * 8 * 128 * 4)
    vmem_limit = int(block_bytes + weight_bytes + (6 << 20))

    cost = pl.CostEstimate(
        flops=2 * B * (3 * CL) * 24 + 2 * B * 24 * 3 + 4 * B * 3 * CL,
        transcendentals=3 * B,
        bytes_accessed=6 * B * CL * itemsize + (3 * CL * 24 + 24 + 24 * 3 + 3) * 4,
    )

    out_flat = pl.pallas_call(
        _shell_attention_kernel,
        out_shape=jax.ShapeDtypeStruct((B, 3 * CL), dtype),
        grid=grid,
        in_specs=[
            pl.BlockSpec((tb, CL), lambda i: (i, 0)),
            pl.BlockSpec((tb, CL), lambda i: (i, 0)),
            pl.BlockSpec((tb, CL), lambda i: (i, 0)),
            pl.BlockSpec((CL, 24), lambda i: (0, 0)),   # weights stay resident
            pl.BlockSpec((CL, 24), lambda i: (0, 0)),
            pl.BlockSpec((CL, 24), lambda i: (0, 0)),
            pl.BlockSpec((1, 24), lambda i: (0, 0)),
            pl.BlockSpec((24, 3), lambda i: (0, 0)),
            pl.BlockSpec((1, 3), lambda i: (0, 0)),
        ],
        out_specs=pl.BlockSpec((tb, 3 * CL), lambda i: (i, 0)),
        compiler_params=pltpu.CompilerParams(
            dimension_semantics=("parallel",),
            vmem_limit_bytes=vmem_limit,
        ),
        cost_estimate=cost,
    )(x0, x1, x2, wm0, wm1, wm2, b1_2d, W2f, b2_2d)

    # Free (contiguous) reshape back to the module's (B, 3*C, L) layout.
    return out_flat.reshape(B, 3 * C, L)


def shell_attention_ref(shells, W1, b1, W2, b2):
    """Pure-JAX reference matching the PyTorch module exactly."""
    concat = jnp.concatenate([s.mean(-1) for s in shells], axis=-1)     # (B, 48)
    h = concat @ W1 + b1
    h = jnp.where(h > 0, h, 0.1 * h)
    logits = h @ W2 + b2
    w = jax.nn.softmax(logits, axis=-1)                                  # (B, 3)
    weighted = [s * w[:, i][:, None, None] for i, s in enumerate(shells)]
    return jnp.concatenate(weighted, axis=1)


if __name__ == "__main__":
    key = jax.random.PRNGKey(0)
    keys = jax.random.split(key, 12)

    # Deterministic parameters (shapes from nn.Linear(48,24) / nn.Linear(24,3);
    # stored as (in, out) so that x @ W == x @ weight.T in PyTorch terms).
    W1 = jax.random.normal(keys[3], (48, 24), dtype=jnp.float32) * 0.1
    b1 = jax.random.normal(keys[4], (24,), dtype=jnp.float32) * 0.1
    W2 = jax.random.normal(keys[5], (24, 3), dtype=jnp.float32) * 0.1
    b2 = jax.random.normal(keys[6], (3,), dtype=jnp.float32) * 0.1

    # --- small case (matches module sizes): B=2, C=16, L=8 -------------------
    B, C, L = 2, 16, 8
    shells = [jax.random.normal(keys[i], (B, C, L), dtype=jnp.float32) for i in range(3)]
    out = jax.block_until_ready(shell_attention(shells, W1, b1, W2, b2))
    ref = shell_attention_ref(shells, W1, b1, W2, b2)
    assert out.shape == (B, 3 * C, L)
    assert jnp.allclose(out, ref, atol=5e-5, rtol=5e-5), "mismatch vs reference (small)"

    # --- exercise the multi-step pipelined grid path (forced batch tile) -----
    B2 = 48
    shells2 = [jax.random.normal(keys[7 + i], (B2, C, L), dtype=jnp.float32) for i in range(3)]
    out2 = jax.block_until_ready(
        shell_attention(shells2, W1, b1, W2, b2, batch_tile=16))   # grid = (3,)
    ref2 = shell_attention_ref(shells2, W1, b1, W2, b2)
    assert out2.shape == (B2, 3 * C, L)
    assert jnp.allclose(out2, ref2, atol=5e-5, rtol=5e-5), "mismatch vs reference (gridded)"

    # --- bf16 path: native-dtype tiles, (16,128) sublane-aligned tile --------
    shells_bf = [s.astype(jnp.bfloat16) for s in shells2]
    out3 = jax.block_until_ready(
        shell_attention(shells_bf, W1, b1, W2, b2, batch_tile=16))
    ref3 = shell_attention_ref([s.astype(jnp.float32) for s in shells_bf], W1, b1, W2, b2)
    assert out3.shape == (B2, 3 * C, L)
    assert jnp.allclose(out3.astype(jnp.float32), ref3, atol=1e-1, rtol=1e-1), \
        "mismatch vs reference (bf16)"

    print("KERNEL_OK")
</pallas_src>

<mosaic_0001>
module attributes {stable_mosaic.version = 11 : i64} {
  func.func @_shell_attention_kernel(%arg0: i32, %arg1: memref<2x128xf32, #tpu.memory_space<vmem>>, %arg2: memref<2x128xf32, #tpu.memory_space<vmem>>, %arg3: memref<2x128xf32, #tpu.memory_space<vmem>>, %arg4: memref<128x24xf32, #tpu.memory_space<vmem>>, %arg5: memref<128x24xf32, #tpu.memory_space<vmem>>, %arg6: memref<128x24xf32, #tpu.memory_space<vmem>>, %arg7: memref<1x24xf32, #tpu.memory_space<vmem>>, %arg8: memref<24x3xf32, #tpu.memory_space<vmem>>, %arg9: memref<1x3xf32, #tpu.memory_space<vmem>>, %arg10: memref<2x384xf32, #tpu.memory_space<vmem>>) attributes {dimension_semantics = [#tpu.dimension_semantics<parallel>], iteration_bounds = array<i64: 1>, scalar_prefetch = 0 : i64, scratch_operands = 0 : i64, tpu.core_type = #tpu.core_type<tc>, window_params = [{transform_indices = @transform_0, window_bounds = array<i64: 2, 128>}, {transform_indices = @transform_1, window_bounds = array<i64: 2, 128>}, {transform_indices = @transform_2, window_bounds = array<i64: 2, 128>}, {pipeline_mode = #tpu.pipeline_mode<synchronous>, transform_indices = @transform_3, window_bounds = array<i64: 128, 24>}, {pipeline_mode = #tpu.pipeline_mode<synchronous>, transform_indices = @transform_4, window_bounds = array<i64: 128, 24>}, {pipeline_mode = #tpu.pipeline_mode<synchronous>, transform_indices = @transform_5, window_bounds = array<i64: 128, 24>}, {pipeline_mode = #tpu.pipeline_mode<synchronous>, transform_indices = @transform_6, window_bounds = array<i64: 1, 24>}, {pipeline_mode = #tpu.pipeline_mode<synchronous>, transform_indices = @transform_7, window_bounds = array<i64: 24, 3>}, {pipeline_mode = #tpu.pipeline_mode<synchronous>, transform_indices = @transform_8, window_bounds = array<i64: 1, 3>}, {transform_indices = @transform_9, window_bounds = array<i64: 2, 384>}]} {
    %c0 = arith.constant 0 : index
    %c0_0 = arith.constant 0 : index
    %0 = vector.load %arg1[%c0, %c0_0] : memref<2x128xf32, #tpu.memory_space<vmem>>, vector<2x128xf32>
    %c0_1 = arith.constant 0 : index
    %c0_2 = arith.constant 0 : index
    %1 = vector.load %arg2[%c0_1, %c0_2] : memref<2x128xf32, #tpu.memory_space<vmem>>, vector<2x128xf32>
    %c0_3 = arith.constant 0 : index
    %c0_4 = arith.constant 0 : index
    %2 = vector.load %arg3[%c0_3, %c0_4] : memref<2x128xf32, #tpu.memory_space<vmem>>, vector<2x128xf32>
    %c0_5 = arith.constant 0 : index
    %c0_6 = arith.constant 0 : index
    %3 = vector.load %arg4[%c0_5, %c0_6] : memref<128x24xf32, #tpu.memory_space<vmem>>, vector<128x24xf32>
    %cst = arith.constant dense<0.000000e+00> : vector<2x24xf32>
    %4 = tpu.matmul %0, %3, %cst {dimension_numbers = #tpu.dot_dimension_numbers<[1], [0], [0], [1], [0, 0, 1, 1], [], []>} : vector<2x128xf32>, vector<128x24xf32>, vector<2x24xf32> -> vector<2x24xf32>
    %c0_7 = arith.constant 0 : index
    %c0_8 = arith.constant 0 : index
    %5 = vector.load %arg5[%c0_7, %c0_8] : memref<128x24xf32, #tpu.memory_space<vmem>>, vector<128x24xf32>
    %cst_9 = arith.constant dense<0.000000e+00> : vector<2x24xf32>
    %6 = tpu.matmul %1, %5, %cst_9 {dimension_numbers = #tpu.dot_dimension_numbers<[1], [0], [0], [1], [0, 0, 1, 1], [], []>} : vector<2x128xf32>, vector<128x24xf32>, vector<2x24xf32> -> vector<2x24xf32>
    %7 = arith.addf %4, %6 : vector<2x24xf32>
    %c0_10 = arith.constant 0 : index
    %c0_11 = arith.constant 0 : index
    %8 = vector.load %arg6[%c0_10, %c0_11] : memref<128x24xf32, #tpu.memory_space<vmem>>, vector<128x24xf32>
    %cst_12 = arith.constant dense<0.000000e+00> : vector<2x24xf32>
    %9 = tpu.matmul %2, %8, %cst_12 {dimension_numbers = #tpu.dot_dimension_numbers<[1], [0], [0], [1], [0, 0, 1, 1], [], []>} : vector<2x128xf32>, vector<128x24xf32>, vector<2x24xf32> -> vector<2x24xf32>
    %10 = arith.addf %7, %9 : vector<2x24xf32>
    %c0_13 = arith.constant 0 : index
    %c0_14 = arith.constant 0 : index
    %11 = vector.load %arg7[%c0_13, %c0_14] : memref<1x24xf32, #tpu.memory_space<vmem>>, vector<1x24xf32>
    %12 = vector.broadcast %11 : vector<1x24xf32> to vector<2x24xf32>
    %13 = arith.addf %10, %12 : vector<2x24xf32>
    %cst_15 = arith.constant 0.000000e+00 : f32
    %14 = vector.broadcast %cst_15 : f32 to vector<2x24xf32>
    %15 = arith.cmpf ogt, %13, %14 : vector<2x24xf32>
    %cst_16 = arith.constant 1.000000e-01 : f32
    %16 = vector.broadcast %cst_16 : f32 to vector<2x24xf32>
    %17 = arith.mulf %16, %13 : vector<2x24xf32>
    %18 = arith.select %15, %13, %17 : vector<2x24xi1>, vector<2x24xf32>
    %c0_17 = arith.constant 0 : index
    %c0_18 = arith.constant 0 : index
    %19 = vector.load %arg8[%c0_17, %c0_18] : memref<24x3xf32, #tpu.memory_space<vmem>>, vector<24x3xf32>
    %cst_19 = arith.constant dense<0.000000e+00> : vector<2x3xf32>
    %20 = tpu.matmul %18, %19, %cst_19 {dimension_numbers = #tpu.dot_dimension_numbers<[1], [0], [0], [1], [0, 0, 1, 1], [], []>} : vector<2x24xf32>, vector<24x3xf32>, vector<2x3xf32> -> vector<2x3xf32>
    %c0_20 = arith.constant 0 : index
    %c0_21 = arith.constant 0 : index
    %21 = vector.load %arg9[%c0_20, %c0_21] : memref<1x3xf32, #tpu.memory_space<vmem>>, vector<1x3xf32>
    %22 = vector.broadcast %21 : vector<1x3xf32> to vector<2x3xf32>
    %23 = arith.addf %20, %22 : vector<2x3xf32>
    %cst_22 = arith.constant dense<0xFF800000> : vector<2xf32>
    %24 = vector.multi_reduction <maximumf>, %23, %cst_22 [1] : vector<2x3xf32> to vector<2xf32>
    %25 = vector.shape_cast %24 : vector<2xf32> to vector<2x1xf32>
    %26 = vector.broadcast %25 : vector<2x1xf32> to vector<2x3xf32>
    %27 = arith.subf %23, %26 : vector<2x3xf32>
    %28 = math.exp %27 : vector<2x3xf32>
    %cst_23 = arith.constant dense<0.000000e+00> : vector<2xf32>
    %29 = vector.multi_reduction <add>, %28, %cst_23 [1] : vector<2x3xf32> to vector<2xf32>
    %30 = vector.shape_cast %29 : vector<2xf32> to vector<2x1xf32>
    %31 = tpu.reciprocal %30 : vector<2x1xf32> -> vector<2x1xf32>
    %32 = vector.broadcast %31 : vector<2x1xf32> to vector<2x3xf32>
    %33 = arith.mulf %28, %32 : vector<2x3xf32>
    %34 = vector.extract_strided_slice %33 {offsets = [0, 0], sizes = [2, 1], strides = [1, 1]} : vector<2x3xf32> to vector<2x1xf32>
    %35 = vector.broadcast %34 : vector<2x1xf32> to vector<2x128xf32>
    %36 = arith.mulf %0, %35 : vector<2x128xf32>
    %c0_24 = arith.constant 0 : index
    %c0_25 = arith.constant 0 : index
    %37 = vector.load %arg10[%c0_24, %c0_25] : memref<2x384xf32, #tpu.memory_space<vmem>>, vector<2x128xf32>
    tpu.vector_store %arg10[%c0_24, %c0_25], %36 {strides = array<i32>} : memref<2x384xf32, #tpu.memory_space<vmem>>, vector<2x128xf32>,
    %38 = vector.extract_strided_slice %33 {offsets = [0, 1], sizes = [2, 1], strides = [1, 1]} : vector<2x3xf32> to vector<2x1xf32>
    %39 = vector.broadcast %38 : vector<2x1xf32> to vector<2x128xf32>
    %40 = arith.mulf %1, %39 : vector<2x128xf32>
    %c0_26 = arith.constant 0 : index
    %c128 = arith.constant 128 : index
    %41 = vector.load %arg10[%c0_26, %c128] : memref<2x384xf32, #tpu.memory_space<vmem>>, vector<2x128xf32>
    tpu.vector_store %arg10[%c0_26, %c128], %40 {strides = array<i32>} : memref<2x384xf32, #tpu.memory_space<vmem>>, vector<2x128xf32>,
    %42 = vector.extract_strided_slice %33 {offsets = [0, 2], sizes = [2, 1], strides = [1, 1]} : vector<2x3xf32> to vector<2x1xf32>
    %43 = vector.broadcast %42 : vector<2x1xf32> to vector<2x128xf32>
    %44 = arith.mulf %2, %43 : vector<2x128xf32>
    %c0_27 = arith.constant 0 : index
    %c256 = arith.constant 256 : index
    %45 = vector.load %arg10[%c0_27, %c256] : memref<2x384xf32, #tpu.memory_space<vmem>>, vector<2x128xf32>
    tpu.vector_store %arg10[%c0_27, %c256], %44 {strides = array<i32>} : memref<2x384xf32, #tpu.memory_space<vmem>>, vector<2x128xf32>,
    return
  }
  func.func @transform_0(%arg0: i32) -> (i32, i32) {
    %c0_i32 = arith.constant 0 : i32
    %c0_i32_0 = arith.constant 0 : i32
    return %arg0, %c0_i32 : i32, i32
  }
  func.func @transform_1(%arg0: i32) -> (i32, i32) {
    %c0_i32 = arith.constant 0 : i32
    %c0_i32_0 = arith.constant 0 : i32
    return %arg0, %c0_i32 : i32, i32
  }
  func.func @transform_2(%arg0: i32) -> (i32, i32) {
    %c0_i32 = arith.constant 0 : i32
    %c0_i32_0 = arith.constant 0 : i32
    return %arg0, %c0_i32 : i32, i32
  }
  func.func @transform_3(%arg0: i32) -> (i32, i32) {
    %c0_i32 = arith.constant 0 : i32
    %c0_i32_0 = arith.constant 0 : i32
    %c0_i32_1 = arith.constant 0 : i32
    return %c0_i32, %c0_i32_0 : i32, i32
  }
  func.func @transform_4(%arg0: i32) -> (i32, i32) {
    %c0_i32 = arith.constant 0 : i32
    %c0_i32_0 = arith.constant 0 : i32
    %c0_i32_1 = arith.constant 0 : i32
    return %c0_i32, %c0_i32_0 : i32, i32
  }
  func.func @transform_5(%arg0: i32) -> (i32, i32) {
    %c0_i32 = arith.constant 0 : i32
    %c0_i32_0 = arith.constant 0 : i32
    %c0_i32_1 = arith.constant 0 : i32
    return %c0_i32, %c0_i32_0 : i32, i32
  }
  func.func @transform_6(%arg0: i32) -> (i32, i32) {
    %c0_i32 = arith.constant 0 : i32
    %c0_i32_0 = arith.constant 0 : i32
    %c0_i32_1 = arith.constant 0 : i32
    return %c0_i32, %c0_i32_0 : i32, i32
  }
  func.func @transform_7(%arg0: i32) -> (i32, i32) {
    %c0_i32 = arith.constant 0 : i32
    %c0_i32_0 = arith.constant 0 : i32
    %c0_i32_1 = arith.constant 0 : i32
    return %c0_i32, %c0_i32_0 : i32, i32
  }
  func.func @transform_8(%arg0: i32) -> (i32, i32) {
    %c0_i32 = arith.constant 0 : i32
    %c0_i32_0 = arith.constant 0 : i32
    %c0_i32_1 = arith.constant 0 : i32
    return %c0_i32, %c0_i32_0 : i32, i32
  }
  func.func @transform_9(%arg0: i32) -> (i32, i32) {
    %c0_i32 = arith.constant 0 : i32
    %c0_i32_0 = arith.constant 0 : i32
    return %arg0, %c0_i32 : i32, i32
  }
}

</mosaic_0001>

<llo_original>
// kernel: tpu_custom_call.1
$region0: #{tpu_custom_call.1}
  #allocation0 [shape = 'u32[]', space=smem, size = 0x4, offset = 0x4, fixed_abs, tag = 'smem constant byte address 0x4 - core index']
  #allocation1 [shape = 'u32[72,128]{1,0:T(1,128)}', space=vmem, size = 0x9000, scoped, tag = 'internal scratch']
  %s0 = inlined_call_operand.vmem [shape: f32[2,128], index: 0, kind: input, shape index: {}]
  %s1 = inlined_call_operand.vmem [shape: f32[2,128], index: 1, kind: input, shape index: {}]
  %s2 = inlined_call_operand.vmem [shape: f32[2,128], index: 2, kind: input, shape index: {}]
  %s3 = inlined_call_operand.vmem [shape: f32[128,24], index: 3, kind: input, shape index: {}]
  %s4 = inlined_call_operand.vmem [shape: f32[128,24], index: 4, kind: input, shape index: {}]
  %s5 = inlined_call_operand.vmem [shape: f32[128,24], index: 5, kind: input, shape index: {}]
  %s6 = inlined_call_operand.vmem [shape: f32[1,24], index: 6, kind: input, shape index: {}]
  %s7 = inlined_call_operand.vmem [shape: f32[24,3], index: 7, kind: input, shape index: {}]
  %s8 = inlined_call_operand.vmem [shape: f32[1,3], index: 8, kind: input, shape index: {}]
  %s9 = inlined_call_operand.hbm [shape: f32[2,384], index: 9, kind: output, shape index: {}]
  %s10 = sld [smem:[#allocation0]]
  $region46: #{tpu_custom_call.1} parent=0
    _
  %s12 = ssub.s32 1, %s10
  %s13 = scalar_select 0, %s12, %s10
  $region1: #{tpu_custom_call.1} parent=0
    #allocation2 [shape = 'u8[3072]{0}', space=vmem, size = 0xc00, scoped, tag = 'output window, operand 0, single buffered']
    #allocation3 [shape = 's32[1]{0}', space=sflag, size = 0x4, scoped, tag = 'scoped memory for tpu_custom_call.1']
    %14 = vsyncpa [#allocation3], 0
    // Predicated region
    $region2: #{tpu_custom_call.1} parent=1 // pred_check
      _
    $region3: #{tpu_custom_call.1} parent=1 // pred_check_branch
      %16 = sbr.rel (0) target = $region5
    $region4: #{tpu_custom_call.1} parent=1 // pred_region
      _
    $region5: #{tpu_custom_call.1} parent=1 // pred_fallthru
      _
    // Predicated region
    $region6: #{tpu_custom_call.1} parent=1 // pred_check
      _
    $region7: #{tpu_custom_call.1} parent=1 // pred_check_branch
      %18 = sbr.rel (0) target = $region9
    $region8: #{tpu_custom_call.1} parent=1 // pred_region
      _
    $region9: #{tpu_custom_call.1} parent=1 // pred_fallthru
      _
    // Predicated region
    $region10: #{tpu_custom_call.1} parent=1 // pred_check
      _
    $region11: #{tpu_custom_call.1} parent=1 // pred_check_branch
      %20 = sbr.rel (0) target = $region13
    $region12: #{tpu_custom_call.1} parent=1 // pred_region
      _
    $region13: #{tpu_custom_call.1} parent=1 // pred_fallthru
      _
    // Predicated region
    $region14: #{tpu_custom_call.1} parent=1 // pred_check
      _
    $region15: #{tpu_custom_call.1} parent=1 // pred_check_branch
      %22 = sbr.rel (0) target = $region17
    $region16: #{tpu_custom_call.1} parent=1 // pred_region
      _
    $region17: #{tpu_custom_call.1} parent=1 // pred_fallthru
      _
    // Predicated region
    $region18: #{tpu_custom_call.1} parent=1 // pred_check
      _
    $region19: #{tpu_custom_call.1} parent=1 // pred_check_branch
      %24 = sbr.rel (0) target = $region21
    $region20: #{tpu_custom_call.1} parent=1 // pred_region
      _
    $region21: #{tpu_custom_call.1} parent=1 // pred_fallthru
      _
    // Predicated region
    $region22: #{tpu_custom_call.1} parent=1 // pred_check
      _
    $region23: #{tpu_custom_call.1} parent=1 // pred_check_branch
      %26 = sbr.rel (0) target = $region25
    $region24: #{tpu_custom_call.1} parent=1 // pred_region
      _
    $region25: #{tpu_custom_call.1} parent=1 // pred_fallthru
      _
    // Predicated region
    $region26: #{tpu_custom_call.1} parent=1 // pred_check
      _
    $region27: #{tpu_custom_call.1} parent=1 // pred_check_branch
      %28 = sbr.rel (0) target = $region29
    $region28: #{tpu_custom_call.1} parent=1 // pred_region
      _
    $region29: #{tpu_custom_call.1} parent=1 // pred_fallthru
      _
    // Predicated region
    $region30: #{tpu_custom_call.1} parent=1 // pred_check
      _
    $region31: #{tpu_custom_call.1} parent=1 // pred_check_branch
      %30 = sbr.rel (0) target = $region33
    $region32: #{tpu_custom_call.1} parent=1 // pred_region
      _
    $region33: #{tpu_custom_call.1} parent=1 // pred_fallthru
      _
    // Predicated region
    $region34: #{tpu_custom_call.1} parent=1 // pred_check
      _
    $region35: #{tpu_custom_call.1} parent=1 // pred_check_branch
      %32 = sbr.rel (0) target = $region37
    $region36: #{tpu_custom_call.1} parent=1 // pred_region
      _
    $region37: #{tpu_custom_call.1} parent=1 // pred_fallthru
      _
    %v33 = vld [vmem:[%s0] sm:$0x3]
    %v34 = vld [vmem:[%s1] sm:$0x3]
    %v35 = vld [vmem:[%s2] sm:$0x3]
    %v36 = vld [vmem:[%s3] sm:$0xff]
    %v37 = vld [vmem:[%s3 + $0x8] sm:$0xff]
    %v38 = vld [vmem:[%s3 + $0x10] sm:$0xff]
    %v39 = vld [vmem:[%s3 + $0x18] sm:$0xff]
    %v40 = vld [vmem:[%s3 + $0x20] sm:$0xff]
    %v41 = vld [vmem:[%s3 + $0x28] sm:$0xff]
    %v42 = vld [vmem:[%s3 + $0x30] sm:$0xff]
    %v43 = vld [vmem:[%s3 + $0x38] sm:$0xff]
    %v44 = vld [vmem:[%s3 + $0x40] sm:$0xff]
    %v45 = vld [vmem:[%s3 + $0x48] sm:$0xff]
    %v46 = vld [vmem:[%s3 + $0x50] sm:$0xff]
    %v47 = vld [vmem:[%s3 + $0x58] sm:$0xff]
    %v48 = vld [vmem:[%s3 + $0x60] sm:$0xff]
    %v49 = vld [vmem:[%s3 + $0x68] sm:$0xff]
    %v50 = vld [vmem:[%s3 + $0x70] sm:$0xff]
    %v51 = vld [vmem:[%s3 + $0x78] sm:$0xff]
    %v52 = vld [vmem:[%s4] sm:$0xff]
    %v53 = vld [vmem:[%s4 + $0x8] sm:$0xff]
    %v54 = vld [vmem:[%s4 + $0x10] sm:$0xff]
    %v55 = vld [vmem:[%s4 + $0x18] sm:$0xff]
    %v56 = vld [vmem:[%s4 + $0x20] sm:$0xff]
    %v57 = vld [vmem:[%s4 + $0x28] sm:$0xff]
    %v58 = vld [vmem:[%s4 + $0x30] sm:$0xff]
    %v59 = vld [vmem:[%s4 + $0x38] sm:$0xff]
    %v60 = vld [vmem:[%s4 + $0x40] sm:$0xff]
    %v61 = vld [vmem:[%s4 + $0x48] sm:$0xff]
    %v62 = vld [vmem:[%s4 + $0x50] sm:$0xff]
    %v63 = vld [vmem:[%s4 + $0x58] sm:$0xff]
    %v64 = vld [vmem:[%s4 + $0x60] sm:$0xff]
    %v65 = vld [vmem:[%s4 + $0x68] sm:$0xff]
    %v66 = vld [vmem:[%s4 + $0x70] sm:$0xff]
    %v67 = vld [vmem:[%s4 + $0x78] sm:$0xff]
    %68 = vmatpush.msra.mxu0 %v67
    %69 = vmatpush.msra.mxu0 %v66
    %70 = vmatpush.msra.mxu0 %v65
    %71 = vmatpush.msra.mxu0 %v64
    %72 = vmatpush.msra.mxu0 %v63
    %73 = vmatpush.msra.mxu0 %v62
    %74 = vmatpush.msra.mxu0 %v61
    %75 = vmatpush.msra.mxu0 %v60
    %76 = vmatpush.msra.mxu0 %v59
    %77 = vmatpush.msra.mxu0 %v58
    %78 = vmatpush.msra.mxu0 %v57
    %79 = vmatpush.msra.mxu0 %v56
    %80 = vmatpush.msra.mxu0 %v55
    %81 = vmatpush.msra.mxu0 %v54
    %82 = vmatpush.msra.mxu0 %v53
    %83 = vmatpush.msra.mxu0 %v52
    %84 = vmatmul.f32.gmra.mxu0 %v34
    %v85 = vpop.f32.mrf.mxu0
    %v86 = vadd.f32 0.0, %v85
    %87 = vdwg.mxu0
    %88 = vmatpush.msra.mxu0 %v51
    %89 = vmatpush.msra.mxu0 %v50
    %90 = vmatpush.msra.mxu0 %v49
    %91 = vmatpush.msra.mxu0 %v48
    %92 = vmatpush.msra.mxu0 %v47
    %93 = vmatpush.msra.mxu0 %v46
    %94 = vmatpush.msra.mxu0 %v45
    %95 = vmatpush.msra.mxu0 %v44
    %96 = vmatpush.msra.mxu0 %v43
    %97 = vmatpush.msra.mxu0 %v42
    %98 = vmatpush.msra.mxu0 %v41
    %99 = vmatpush.msra.mxu0 %v40
    %100 = vmatpush.msra.mxu0 %v39
    %101 = vmatpush.msra.mxu0 %v38
    %102 = vmatpush.msra.mxu0 %v37
    %103 = vmatpush.msra.mxu0 %v36
    %104 = vmatmul.f32.gmra.mxu0 %v33
    %v105 = vpop.f32.mrf.mxu0
    %v106 = vadd.f32 %v86, %v105
    %107 = vdwg.mxu0
    %v108 = vld [vmem:[%s5] sm:$0xff]
    %v109 = vld [vmem:[%s5 + $0x8] sm:$0xff]
    %v110 = vld [vmem:[%s5 + $0x10] sm:$0xff]
    %v111 = vld [vmem:[%s5 + $0x18] sm:$0xff]
    %v112 = vld [vmem:[%s5 + $0x20] sm:$0xff]
    %v113 = vld [vmem:[%s5 + $0x28] sm:$0xff]
    %v114 = vld [vmem:[%s5 + $0x30] sm:$0xff]
    %v115 = vld [vmem:[%s5 + $0x38] sm:$0xff]
    %v116 = vld [vmem:[%s5 + $0x40] sm:$0xff]
    %v117 = vld [vmem:[%s5 + $0x48] sm:$0xff]
    %v118 = vld [vmem:[%s5 + $0x50] sm:$0xff]
    %v119 = vld [vmem:[%s5 + $0x58] sm:$0xff]
    %v120 = vld [vmem:[%s5 + $0x60] sm:$0xff]
    %v121 = vld [vmem:[%s5 + $0x68] sm:$0xff]
    %v122 = vld [vmem:[%s5 + $0x70] sm:$0xff]
    %v123 = vld [vmem:[%s5 + $0x78] sm:$0xff]
    %124 = vmatpush.msra.mxu0 %v123
    %125 = vmatpush.msra.mxu0 %v122
    %126 = vmatpush.msra.mxu0 %v121
    %127 = vmatpush.msra.mxu0 %v120
    %128 = vmatpush.msra.mxu0 %v119
    %129 = vmatpush.msra.mxu0 %v118
    %130 = vmatpush.msra.mxu0 %v117
    %131 = vmatpush.msra.mxu0 %v116
    %132 = vmatpush.msra.mxu0 %v115
    %133 = vmatpush.msra.mxu0 %v114
    %134 = vmatpush.msra.mxu0 %v113
    %135 = vmatpush.msra.mxu0 %v112
    %136 = vmatpush.msra.mxu0 %v111
    %137 = vmatpush.msra.mxu0 %v110
    %138 = vmatpush.msra.mxu0 %v109
    %139 = vmatpush.msra.mxu0 %v108
    %140 = vmatmul.f32.gmra.mxu0 %v35
    %v141 = vpop.f32.mrf.mxu0
    %v142 = vadd.f32 0.0, %v141
    %143 = vdwg.mxu0
    %v144 = vadd.f32 %v106, %v142
    %v145 = vld [vmem:[%s6] sm:$0x1]
    %v147 = vperm.slane %v145, 0
    %v149 = vadd.f32 %v144, %v147
    %vm150 = vcmp.gt.f32.partialorder %v149, 0.0
    %v151 = vmul.f32 %v149, 0.1
    %v152 = vsel %vm150, %v149, %v151
    %v153 = vld [vmem:[%s7] sm:$0xff]
    %v154 = vld [vmem:[%s7 + $0x8] sm:$0xff]
    %v155 = vld [vmem:[%s7 + $0x10] sm:$0xff]
    %v156 = vld [vmem:[%s8] sm:$0x1]
    %v158 = vperm.slane %v156, 0
    %vm160 = vcmask 195584
    %v162 = vsel %vm160, %v152, 0
    %164 = vmatpush.msra.mxu0 0.0
    %165 = vmatpush.msra.mxu0 0.0
    %166 = vmatpush.msra.mxu0 0.0
    %167 = vmatpush.msra.mxu0 0.0
    %168 = vmatpush.msra.mxu0 0.0
    %169 = vmatpush.msra.mxu0 0.0
    %170 = vmatpush.msra.mxu0 0.0
    %171 = vmatpush.msra.mxu0 0.0
    %172 = vmatpush.msra.mxu0 0.0
    %173 = vmatpush.msra.mxu0 0.0
    %174 = vmatpush.msra.mxu0 0.0
    %175 = vmatpush.msra.mxu0 0.0
    %176 = vmatpush.msra.mxu0 0.0
    %177 = vmatpush.msra.mxu0 %v155
    %178 = vmatpush.msra.mxu0 %v154
    %179 = vmatpush.msra.mxu0 %v153
    %180 = vmatmul.f32.gmra.mxu0 %v162
    %v181 = vpop.f32.mrf.mxu0
    %v182 = vadd.f32 %v158, %v181
    %183 = vdwg.mxu0
    %vm184 = vcmask 17408
    %v185 = vsel %vm184, %v182, -inf
    %186 = vmax.xlane.f32.xlu0 %v185
    %v187 = vpop.xlane.xlu0 %186
    %v188 = vsub.f32 %v182, %v187
    %v189 = vmul.f32 %v188, 1.442695
    %v190 = vpow.pop %v189
    %v191 = vsel %vm184, %v190, 0.0
    %192 = vadd.xlane.f32.xlu0 %v191
    %v193 = vpop.xlane.xlu0 %192
    %v194 = vrcp.pop %v193
    %v195 = vmul.f32 %v193, %v194
    %v196 = vsub.f32 1.0, %v195
    %v197 = vmul.f32 %v194, %v196
    %v198 = vadd.f32 %v194, %v197
    %vm199 = vweird.f32 %v193
    %vm200 = vweird.f32 %v194
    %vm201 = vmor %vm199, %vm200
    %v202 = vsel %vm201, %v194, %v198
    %v203 = vand.u32 2147483647, %v193
    %vm204 = vcmp.eq.f32.partialorder %v203, 8.507059e+37
    %v205 = vand.u32 %v193, 2147483648
    %v206 = vor.u32 1.1754944e-38, %v205
    %v207 = vsel %vm204, %v206, %v202
    %v208 = vmul.f32 %v190, %v207
    %210 = vset.pattern.permute.xlu0 0
    %211 = vperm.xlu0 %210, %v208
    %v212 = vpop.permute.xlu0 %211
    %v214 = vmul.f32 %v33, %v212
    %215 = vst [vmem:[#allocation2] sm:$0x3] %v214
    %216 = vset.pattern.permute.xlu0 1
    %217 = vperm.xlu0 %216, %v208
    %v218 = vpop.permute.xlu0 %217
    %v220 = vmul.f32 %v34, %v218
    %221 = vst [vmem:[#allocation2 + $0x2] sm:$0x3] %v220
    %222 = vset.pattern.permute.xlu0 2
    %223 = vperm.xlu0 %222, %v208
    %v224 = vpop.permute.xlu0 %223
    %v226 = vmul.f32 %v35, %v224
    %227 = vst [vmem:[#allocation2 + $0x4] sm:$0x3] %v226
    // Predicated region
    $region38: #{tpu_custom_call.1} parent=1 // pred_check
      _
    $region39: #{tpu_custom_call.1} parent=1 // pred_check_branch
      %229 = sbr.rel (0) target = $region41
    $region40: #{tpu_custom_call.1} parent=1 // pred_region
      %231 = vsyncadd [#allocation3], 0
      %s233 = sshll.u32 [#allocation2], 4
      %s234 = int_to_ptr.vmem [resolvable:$true] %s233
      %s235 = sshll.u32 %s9, 4
      %s236 = int_to_ptr.hbm [resolvable:$true] %s235
      %238 = dma.vmem_to_hbm [thread:$0]  %s234, 96, %s236, [#allocation3]
    $region41: #{tpu_custom_call.1} parent=1 // pred_fallthru
      _
    // Predicated region
    $region42: #{tpu_custom_call.1} parent=1 // pred_check
      _
    $region43: #{tpu_custom_call.1} parent=1 // pred_check_branch
      %240 = sbr.rel (0) target = $region45
    $region44: #{tpu_custom_call.1} parent=1 // pred_region
      %242 = dma.done [#allocation3], 96
    $region45: #{tpu_custom_call.1} parent=1 // pred_fallthru
      _
    %243 = vsyncpa [#allocation3], 1

</llo_original>
